<compile_context>
chip_gen: v7x
topology: tpu7x:2x2x1
jax: 0.10.0
libtpu: 0.0.40
codegen_flags: <defaults>
</compile_context>

<pallas_src>
import jax
import jax.numpy as jnp
from jax.experimental import pallas as pl
from jax.experimental.pallas import tpu as pltpu


# ----------------------------------------------------------------------------
# Kernel
# ----------------------------------------------------------------------------

def _ln_kernel(x_ref, g_ref, b_ref, o_ref):
    # x_ref: (TM, C) tile in native dtype; g_ref/b_ref: (1, C) f32 resident.
    x = x_ref[...].astype(jnp.float32)
    mu = jnp.mean(x, axis=-1, keepdims=True)
    xc = x - mu
    var = jnp.mean(xc * xc, axis=-1, keepdims=True)        # biased (unbiased=False)
    y = xc * jax.lax.rsqrt(var + 1e-5) * g_ref[...] + b_ref[...]
    o_ref[...] = y.astype(o_ref.dtype)


# ----------------------------------------------------------------------------
# Wrapper
# ----------------------------------------------------------------------------

_ROW_ALIGN = 16  # sublane-friendly for f32 (8) and bf16/f16 (16)


def _pick_tile_rows(m, c, itemsize, vmem_budget_bytes=24 << 20):
    """Largest 16-aligned row tile (<=2048) such that double-buffered in+out
    tiles stay under the VMEM budget (safe for v7x's 32 MiB scoped default)."""
    bytes_per_row = 2 * 2 * c * itemsize          # (in + out) x double-buffer
    tm = vmem_budget_bytes // max(bytes_per_row, 1)
    tm = max(_ROW_ALIGN, min(2048, (tm // _ROW_ALIGN) * _ROW_ALIGN))
    m_a = ((m + _ROW_ALIGN - 1) // _ROW_ALIGN) * _ROW_ALIGN
    return min(tm, m_a)


@jax.jit
def with_bias_layernorm(x, weight, bias):
    """LayerNorm over the last axis, WithBias variant (matches the PyTorch module)."""
    orig_shape = x.shape
    c = orig_shape[-1]
    m = 1
    for d in orig_shape[:-1]:
        m *= d

    x2 = x.reshape(m, c)                           # view-style reshape, native dtype

    tm = _pick_tile_rows(m, c, x2.dtype.itemsize)
    m_pad = ((m + tm - 1) // tm) * tm
    if m_pad != m:
        x2 = jnp.pad(x2, ((0, m_pad - m), (0, 0)))

    out = pl.pallas_call(
        _ln_kernel,
        out_shape=jax.ShapeDtypeStruct((m_pad, c), x.dtype),
        grid_spec=pltpu.PrefetchScalarGridSpec(
            num_scalar_prefetch=0,
            grid=(m_pad // tm,),
            in_specs=[
                pl.BlockSpec((tm, c), lambda i: (i, 0)),   # activation rows (native dtype)
                pl.BlockSpec((1, c), lambda i: (0, 0)),    # weight (f32, resident)
                pl.BlockSpec((1, c), lambda i: (0, 0)),    # bias   (f32, resident)
            ],
            out_specs=pl.BlockSpec((tm, c), lambda i: (i, 0)),
        ),
        compiler_params=pltpu.CompilerParams(
            dimension_semantics=("parallel",),             # megacore-shardable on v7x
            vmem_limit_bytes=32 << 20,                     # headroom vs. 24 MiB tile budget
        ),
    )(x2,
      weight.reshape(1, c).astype(jnp.float32),
      bias.reshape(1, c).astype(jnp.float32))

    if m_pad != m:
        out = out[:m]
    return out.reshape(orig_shape)


# ----------------------------------------------------------------------------
# Pure-JAX reference (for correctness check)
# ----------------------------------------------------------------------------

def _ref_layernorm(x, weight, bias):
    x = x.astype(jnp.float32)
    mu = jnp.mean(x, axis=-1, keepdims=True)
    var = jnp.mean(jnp.square(x - mu), axis=-1, keepdims=True)
    return (x - mu) / jnp.sqrt(var + 1e-5) * weight + bias


# ----------------------------------------------------------------------------

if __name__ == "__main__":
    key = jax.random.PRNGKey(0)
    kx, kw, kb, kx2, kx3 = jax.random.split(key, 5)

    # Shapes consistent with how net9 uses WithBias_LayerNorm: channels-last
    # feature maps, normalized over the channel axis.
    B, H, W, C = 2, 16, 16, 64
    x = jax.random.normal(kx, (B, H, W, C), dtype=jnp.float32) * 2.0 + 0.5
    weight = 1.0 + 0.05 * jax.random.normal(kw, (C,), dtype=jnp.float32)
    bias = 0.05 * jax.random.normal(kb, (C,), dtype=jnp.float32)

    out = jax.block_until_ready(with_bias_layernorm(x, weight, bias))
    ref = _ref_layernorm(x, weight, bias)
    assert out.shape == x.shape and out.dtype == x.dtype
    assert jnp.all(jnp.isfinite(out))
    assert float(jnp.max(jnp.abs(out - ref))) < 1e-4, float(jnp.max(jnp.abs(out - ref)))

    # Ragged row count / different channel width: exercises the row-padding path.
    B2, S2, C2 = 3, 37, 48
    x2 = jax.random.normal(kx2, (B2, S2, C2), dtype=jnp.float32)
    w2 = jnp.ones((C2,), jnp.float32)
    b2 = jnp.zeros((C2,), jnp.float32)
    out2 = jax.block_until_ready(with_bias_layernorm(x2, w2, b2))
    ref2 = _ref_layernorm(x2, w2, b2)
    assert out2.shape == x2.shape
    assert float(jnp.max(jnp.abs(out2 - ref2))) < 1e-4

    # bf16 activations: exercises the in-kernel upcast / native-dtype I/O path.
    x3 = (jax.random.normal(kx3, (2, 8, 8, 64), dtype=jnp.float32)).astype(jnp.bfloat16)
    out3 = jax.block_until_ready(with_bias_layernorm(x3, weight, bias))
    ref3 = _ref_layernorm(x3, weight, bias)
    assert out3.shape == x3.shape and out3.dtype == jnp.bfloat16
    assert float(jnp.max(jnp.abs(out3.astype(jnp.float32) - ref3))) < 1e-1

    print("KERNEL_OK")
</pallas_src>

<mosaic_0001>
module attributes {stable_mosaic.version = 11 : i64} {
  func.func @_ln_kernel(%arg0: i32, %arg1: memref<512x64xf32, #tpu.memory_space<vmem>>, %arg2: memref<1x64xf32, #tpu.memory_space<vmem>>, %arg3: memref<1x64xf32, #tpu.memory_space<vmem>>, %arg4: memref<512x64xf32, #tpu.memory_space<vmem>>) attributes {dimension_semantics = [#tpu.dimension_semantics<parallel>], iteration_bounds = array<i64: 1>, scalar_prefetch = 0 : i64, scratch_operands = 0 : i64, tpu.core_type = #tpu.core_type<tc>, window_params = [{transform_indices = @transform_0, window_bounds = array<i64: 512, 64>}, {pipeline_mode = #tpu.pipeline_mode<synchronous>, transform_indices = @transform_1, window_bounds = array<i64: 1, 64>}, {pipeline_mode = #tpu.pipeline_mode<synchronous>, transform_indices = @transform_2, window_bounds = array<i64: 1, 64>}, {transform_indices = @transform_3, window_bounds = array<i64: 512, 64>}]} {
    %c0 = arith.constant 0 : index
    %c0_0 = arith.constant 0 : index
    %0 = vector.load %arg1[%c0, %c0_0] : memref<512x64xf32, #tpu.memory_space<vmem>>, vector<512x64xf32>
    %cst = arith.constant dense<0.000000e+00> : vector<512xf32>
    %1 = vector.multi_reduction <add>, %0, %cst [1] : vector<512x64xf32> to vector<512xf32>
    %2 = vector.shape_cast %1 : vector<512xf32> to vector<512x1xf32>
    %cst_1 = arith.constant 6.400000e+01 : f32
    %3 = vector.broadcast %cst_1 : f32 to vector<512x1xf32>
    %4 = arith.divf %2, %3 : vector<512x1xf32>
    %5 = vector.broadcast %4 : vector<512x1xf32> to vector<512x64xf32>
    %6 = arith.subf %0, %5 : vector<512x64xf32>
    %7 = arith.mulf %6, %6 : vector<512x64xf32>
    %cst_2 = arith.constant dense<0.000000e+00> : vector<512xf32>
    %8 = vector.multi_reduction <add>, %7, %cst_2 [1] : vector<512x64xf32> to vector<512xf32>
    %9 = vector.shape_cast %8 : vector<512xf32> to vector<512x1xf32>
    %cst_3 = arith.constant 6.400000e+01 : f32
    %10 = vector.broadcast %cst_3 : f32 to vector<512x1xf32>
    %11 = arith.divf %9, %10 : vector<512x1xf32>
    %cst_4 = arith.constant 9.99999974E-6 : f32
    %12 = vector.broadcast %cst_4 : f32 to vector<512x1xf32>
    %13 = arith.addf %11, %12 : vector<512x1xf32>
    %14 = math.rsqrt %13 : vector<512x1xf32>
    %15 = vector.broadcast %14 : vector<512x1xf32> to vector<512x64xf32>
    %16 = arith.mulf %6, %15 : vector<512x64xf32>
    %c0_5 = arith.constant 0 : index
    %c0_6 = arith.constant 0 : index
    %17 = vector.load %arg2[%c0_5, %c0_6] : memref<1x64xf32, #tpu.memory_space<vmem>>, vector<1x64xf32>
    %18 = vector.broadcast %17 : vector<1x64xf32> to vector<512x64xf32>
    %19 = arith.mulf %16, %18 : vector<512x64xf32>
    %c0_7 = arith.constant 0 : index
    %c0_8 = arith.constant 0 : index
    %20 = vector.load %arg3[%c0_7, %c0_8] : memref<1x64xf32, #tpu.memory_space<vmem>>, vector<1x64xf32>
    %21 = vector.broadcast %20 : vector<1x64xf32> to vector<512x64xf32>
    %22 = arith.addf %19, %21 : vector<512x64xf32>
    %c0_9 = arith.constant 0 : index
    %c0_10 = arith.constant 0 : index
    %23 = vector.load %arg4[%c0_9, %c0_10] : memref<512x64xf32, #tpu.memory_space<vmem>>, vector<512x64xf32>
    tpu.vector_store %arg4[%c0_9, %c0_10], %22 {strides = array<i32>} : memref<512x64xf32, #tpu.memory_space<vmem>>, vector<512x64xf32>,
    return
  }
  func.func @transform_0(%arg0: i32) -> (i32, i32) {
    %c0_i32 = arith.constant 0 : i32
    %c0_i32_0 = arith.constant 0 : i32
    return %arg0, %c0_i32 : i32, i32
  }
  func.func @transform_1(%arg0: i32) -> (i32, i32) {
    %c0_i32 = arith.constant 0 : i32
    %c0_i32_0 = arith.constant 0 : i32
    %c0_i32_1 = arith.constant 0 : i32
    return %c0_i32, %c0_i32_0 : i32, i32
  }
  func.func @transform_2(%arg0: i32) -> (i32, i32) {
    %c0_i32 = arith.constant 0 : i32
    %c0_i32_0 = arith.constant 0 : i32
    %c0_i32_1 = arith.constant 0 : i32
    return %c0_i32, %c0_i32_0 : i32, i32
  }
  func.func @transform_3(%arg0: i32) -> (i32, i32) {
    %c0_i32 = arith.constant 0 : i32
    %c0_i32_0 = arith.constant 0 : i32
    return %arg0, %c0_i32 : i32, i32
  }
}

</mosaic_0001>

<llo_original>
// kernel: with_bias_layernorm.1
$region0: #{with_bias_layernorm.1}
  #allocation0 [shape = 'u32[]', space=smem, size = 0x4, offset = 0x4, fixed_abs, tag = 'smem constant byte address 0x4 - core index']
  #allocation1 [shape = 'u32[144,128]{1,0:T(1,128)}', space=vmem, size = 0x12000, scoped, tag = 'internal scratch']
  %s0 = inlined_call_operand.hbm [shape: f32[512,64], index: 0, kind: input, shape index: {}]
  %s1 = inlined_call_operand.vmem [shape: f32[1,64], index: 1, kind: input, shape index: {}]
  %s2 = inlined_call_operand.vmem [shape: f32[1,64], index: 2, kind: input, shape index: {}]
  %s3 = inlined_call_operand.hbm [shape: f32[512,64], index: 3, kind: output, shape index: {}]
  %s4 = sld [smem:[#allocation0]]
  $region26: #{with_bias_layernorm.1} parent=0
    _
  %s6 = ssub.s32 1, %s4
  %s7 = scalar_select 0, %s6, %s4
  $region1: #{with_bias_layernorm.1} parent=0
    #allocation2 [shape = 'u8[262144]{0}', space=vmem, size = 0x40000, scoped, tag = 'input window, operand 0, single buffered']
    #allocation3 [shape = 's32[1]{0}', space=sflag, size = 0x4, scoped, tag = 'scoped memory for with_bias_layernorm.1']
    #allocation4 [shape = 's32[1]{0}', space=sflag, size = 0x4, scoped, tag = 'scoped memory for with_bias_layernorm.1']
    #allocation5 [shape = 'u8[262144]{0}', space=vmem, size = 0x40000, scoped, tag = 'output window, operand 0, single buffered']
    %8 = vsyncpa [#allocation3], 0
    %9 = vsyncpa [#allocation4], 0
    // Predicated region
    $region2: #{with_bias_layernorm.1} parent=1 // pred_check
      _
    $region3: #{with_bias_layernorm.1} parent=1 // pred_check_branch
      %11 = sbr.rel (0) target = $region5
    $region4: #{with_bias_layernorm.1} parent=1 // pred_region
      %s13 = ssub.s32 8192, 8192
      %14 = vsyncadd [#allocation3], %s13
      %s15 = sshll.u32 [#allocation2], 4
      %s16 = int_to_ptr.vmem [resolvable:$true] %s15
      %21 = dma.hbm_to_vmem [thread:$0]  %s0, 8192, %s16, [#allocation3], 128, 128, 8
    $region5: #{with_bias_layernorm.1} parent=1 // pred_fallthru
      _
    // Predicated region
    $region6: #{with_bias_layernorm.1} parent=1 // pred_check
      _
    $region7: #{with_bias_layernorm.1} parent=1 // pred_check_branch
      %23 = sbr.rel (0) target = $region9
    $region8: #{with_bias_layernorm.1} parent=1 // pred_region
      _
    $region9: #{with_bias_layernorm.1} parent=1 // pred_fallthru
      _
    // Predicated region
    $region10: #{with_bias_layernorm.1} parent=1 // pred_check
      _
    $region11: #{with_bias_layernorm.1} parent=1 // pred_check_branch
      %25 = sbr.rel (0) target = $region13
    $region12: #{with_bias_layernorm.1} parent=1 // pred_region
      _
    $region13: #{with_bias_layernorm.1} parent=1 // pred_fallthru
      _
    // Predicated region
    $region14: #{with_bias_layernorm.1} parent=1 // pred_check
      _
    $region15: #{with_bias_layernorm.1} parent=1 // pred_check_branch
      %27 = sbr.rel (0) target = $region17
    $region16: #{with_bias_layernorm.1} parent=1 // pred_region
      %28 = dma.done [#allocation3], 8192
    $region17: #{with_bias_layernorm.1} parent=1 // pred_fallthru
      _
    %v29 = vld [vmem:[#allocation2] sm:$0xff]
    %v30 = vld [vmem:[#allocation2 + $0x8] sm:$0xff]
    %v31 = vld [vmem:[#allocation2 + $0x10] sm:$0xff]
    %v32 = vld [vmem:[#allocation2 + $0x18] sm:$0xff]
    %v33 = vld [vmem:[#allocation2 + $0x20] sm:$0xff]
    %v34 = vld [vmem:[#allocation2 + $0x28] sm:$0xff]
    %v35 = vld [vmem:[#allocation2 + $0x30] sm:$0xff]
    %v36 = vld [vmem:[#allocation2 + $0x38] sm:$0xff]
    %v37 = vld [vmem:[#allocation2 + $0x40] sm:$0xff]
    %v38 = vld [vmem:[#allocation2 + $0x48] sm:$0xff]
    %v39 = vld [vmem:[#allocation2 + $0x50] sm:$0xff]
    %v40 = vld [vmem:[#allocation2 + $0x58] sm:$0xff]
    %v41 = vld [vmem:[#allocation2 + $0x60] sm:$0xff]
    %v42 = vld [vmem:[#allocation2 + $0x68] sm:$0xff]
    %v43 = vld [vmem:[#allocation2 + $0x70] sm:$0xff]
    %v44 = vld [vmem:[#allocation2 + $0x78] sm:$0xff]
    %v45 = vld [vmem:[#allocation2 + $0x80] sm:$0xff]
    %v46 = vld [vmem:[#allocation2 + $0x88] sm:$0xff]
    %v47 = vld [vmem:[#allocation2 + $0x90] sm:$0xff]
    %v48 = vld [vmem:[#allocation2 + $0x98] sm:$0xff]
    %v49 = vld [vmem:[#allocation2 + $0xa0] sm:$0xff]
    %v50 = vld [vmem:[#allocation2 + $0xa8] sm:$0xff]
    %v51 = vld [vmem:[#allocation2 + $0xb0] sm:$0xff]
    %v52 = vld [vmem:[#allocation2 + $0xb8] sm:$0xff]
    %v53 = vld [vmem:[#allocation2 + $0xc0] sm:$0xff]
    %v54 = vld [vmem:[#allocation2 + $0xc8] sm:$0xff]
    %v55 = vld [vmem:[#allocation2 + $0xd0] sm:$0xff]
    %v56 = vld [vmem:[#allocation2 + $0xd8] sm:$0xff]
    %v57 = vld [vmem:[#allocation2 + $0xe0] sm:$0xff]
    %v58 = vld [vmem:[#allocation2 + $0xe8] sm:$0xff]
    %v59 = vld [vmem:[#allocation2 + $0xf0] sm:$0xff]
    %v60 = vld [vmem:[#allocation2 + $0xf8] sm:$0xff]
    %v61 = vld [vmem:[#allocation2 + $0x100] sm:$0xff]
    %v62 = vld [vmem:[#allocation2 + $0x108] sm:$0xff]
    %v63 = vld [vmem:[#allocation2 + $0x110] sm:$0xff]
    %v64 = vld [vmem:[#allocation2 + $0x118] sm:$0xff]
    %v65 = vld [vmem:[#allocation2 + $0x120] sm:$0xff]
    %v66 = vld [vmem:[#allocation2 + $0x128] sm:$0xff]
    %v67 = vld [vmem:[#allocation2 + $0x130] sm:$0xff]
    %v68 = vld [vmem:[#allocation2 + $0x138] sm:$0xff]
    %v69 = vld [vmem:[#allocation2 + $0x140] sm:$0xff]
    %v70 = vld [vmem:[#allocation2 + $0x148] sm:$0xff]
    %v71 = vld [vmem:[#allocation2 + $0x150] sm:$0xff]
    %v72 = vld [vmem:[#allocation2 + $0x158] sm:$0xff]
    %v73 = vld [vmem:[#allocation2 + $0x160] sm:$0xff]
    %v74 = vld [vmem:[#allocation2 + $0x168] sm:$0xff]
    %v75 = vld [vmem:[#allocation2 + $0x170] sm:$0xff]
    %v76 = vld [vmem:[#allocation2 + $0x178] sm:$0xff]
    %v77 = vld [vmem:[#allocation2 + $0x180] sm:$0xff]
    %v78 = vld [vmem:[#allocation2 + $0x188] sm:$0xff]
    %v79 = vld [vmem:[#allocation2 + $0x190] sm:$0xff]
    %v80 = vld [vmem:[#allocation2 + $0x198] sm:$0xff]
    %v81 = vld [vmem:[#allocation2 + $0x1a0] sm:$0xff]
    %v82 = vld [vmem:[#allocation2 + $0x1a8] sm:$0xff]
    %v83 = vld [vmem:[#allocation2 + $0x1b0] sm:$0xff]
    %v84 = vld [vmem:[#allocation2 + $0x1b8] sm:$0xff]
    %v85 = vld [vmem:[#allocation2 + $0x1c0] sm:$0xff]
    %v86 = vld [vmem:[#allocation2 + $0x1c8] sm:$0xff]
    %v87 = vld [vmem:[#allocation2 + $0x1d0] sm:$0xff]
    %v88 = vld [vmem:[#allocation2 + $0x1d8] sm:$0xff]
    %v89 = vld [vmem:[#allocation2 + $0x1e0] sm:$0xff]
    %v90 = vld [vmem:[#allocation2 + $0x1e8] sm:$0xff]
    %v91 = vld [vmem:[#allocation2 + $0x1f0] sm:$0xff]
    %v92 = vld [vmem:[#allocation2 + $0x1f8] sm:$0xff]
    %vm93 = vcmask 523264
    %v94 = vsel %vm93, %v29, 0.0
    %95 = vadd.xlane.f32.xlu0 %v94
    %v96 = vpop.xlane.xlu0 %95
    %v97 = vsel %vm93, %v30, 0.0
    %98 = vadd.xlane.f32.xlu0 %v97
    %v99 = vpop.xlane.xlu0 %98
    %v100 = vsel %vm93, %v31, 0.0
    %101 = vadd.xlane.f32.xlu0 %v100
    %v102 = vpop.xlane.xlu0 %101
    %v103 = vsel %vm93, %v32, 0.0
    %104 = vadd.xlane.f32.xlu0 %v103
    %v105 = vpop.xlane.xlu0 %104
    %v106 = vsel %vm93, %v33, 0.0
    %107 = vadd.xlane.f32.xlu0 %v106
    %v108 = vpop.xlane.xlu0 %107
    %v109 = vsel %vm93, %v34, 0.0
    %110 = vadd.xlane.f32.xlu0 %v109
    %v111 = vpop.xlane.xlu0 %110
    %v112 = vsel %vm93, %v35, 0.0
    %113 = vadd.xlane.f32.xlu0 %v112
    %v114 = vpop.xlane.xlu0 %113
    %v115 = vsel %vm93, %v36, 0.0
    %116 = vadd.xlane.f32.xlu0 %v115
    %v117 = vpop.xlane.xlu0 %116
    %v118 = vsel %vm93, %v37, 0.0
    %119 = vadd.xlane.f32.xlu0 %v118
    %v120 = vpop.xlane.xlu0 %119
    %v121 = vsel %vm93, %v38, 0.0
    %122 = vadd.xlane.f32.xlu0 %v121
    %v123 = vpop.xlane.xlu0 %122
    %v124 = vsel %vm93, %v39, 0.0
    %125 = vadd.xlane.f32.xlu0 %v124
    %v126 = vpop.xlane.xlu0 %125
    %v127 = vsel %vm93, %v40, 0.0
    %128 = vadd.xlane.f32.xlu0 %v127
    %v129 = vpop.xlane.xlu0 %128
    %v130 = vsel %vm93, %v41, 0.0
    %131 = vadd.xlane.f32.xlu0 %v130
    %v132 = vpop.xlane.xlu0 %131
    %v133 = vsel %vm93, %v42, 0.0
    %134 = vadd.xlane.f32.xlu0 %v133
    %v135 = vpop.xlane.xlu0 %134
    %v136 = vsel %vm93, %v43, 0.0
    %137 = vadd.xlane.f32.xlu0 %v136
    %v138 = vpop.xlane.xlu0 %137
    %v139 = vsel %vm93, %v44, 0.0
    %140 = vadd.xlane.f32.xlu0 %v139
    %v141 = vpop.xlane.xlu0 %140
    %v142 = vsel %vm93, %v45, 0.0
    %143 = vadd.xlane.f32.xlu0 %v142
    %v144 = vpop.xlane.xlu0 %143
    %v145 = vsel %vm93, %v46, 0.0
    %146 = vadd.xlane.f32.xlu0 %v145
    %v147 = vpop.xlane.xlu0 %146
    %v148 = vsel %vm93, %v47, 0.0
    %149 = vadd.xlane.f32.xlu0 %v148
    %v150 = vpop.xlane.xlu0 %149
    %v151 = vsel %vm93, %v48, 0.0
    %152 = vadd.xlane.f32.xlu0 %v151
    %v153 = vpop.xlane.xlu0 %152
    %v154 = vsel %vm93, %v49, 0.0
    %155 = vadd.xlane.f32.xlu0 %v154
    %v156 = vpop.xlane.xlu0 %155
    %v157 = vsel %vm93, %v50, 0.0
    %158 = vadd.xlane.f32.xlu0 %v157
    %v159 = vpop.xlane.xlu0 %158
    %v160 = vsel %vm93, %v51, 0.0
    %161 = vadd.xlane.f32.xlu0 %v160
    %v162 = vpop.xlane.xlu0 %161
    %v163 = vsel %vm93, %v52, 0.0
    %164 = vadd.xlane.f32.xlu0 %v163
    %v165 = vpop.xlane.xlu0 %164
    %v166 = vsel %vm93, %v53, 0.0
    %167 = vadd.xlane.f32.xlu0 %v166
    %v168 = vpop.xlane.xlu0 %167
    %v169 = vsel %vm93, %v54, 0.0
    %170 = vadd.xlane.f32.xlu0 %v169
    %v171 = vpop.xlane.xlu0 %170
    %v172 = vsel %vm93, %v55, 0.0
    %173 = vadd.xlane.f32.xlu0 %v172
    %v174 = vpop.xlane.xlu0 %173
    %v175 = vsel %vm93, %v56, 0.0
    %176 = vadd.xlane.f32.xlu0 %v175
    %v177 = vpop.xlane.xlu0 %176
    %v178 = vsel %vm93, %v57, 0.0
    %179 = vadd.xlane.f32.xlu0 %v178
    %v180 = vpop.xlane.xlu0 %179
    %v181 = vsel %vm93, %v58, 0.0
    %182 = vadd.xlane.f32.xlu0 %v181
    %v183 = vpop.xlane.xlu0 %182
    %v184 = vsel %vm93, %v59, 0.0
    %185 = vadd.xlane.f32.xlu0 %v184
    %v186 = vpop.xlane.xlu0 %185
    %v187 = vsel %vm93, %v60, 0.0
    %188 = vadd.xlane.f32.xlu0 %v187
    %v189 = vpop.xlane.xlu0 %188
    %v190 = vsel %vm93, %v61, 0.0
    %191 = vadd.xlane.f32.xlu0 %v190
    %v192 = vpop.xlane.xlu0 %191
    %v193 = vsel %vm93, %v62, 0.0
    %194 = vadd.xlane.f32.xlu0 %v193
    %v195 = vpop.xlane.xlu0 %194
    %v196 = vsel %vm93, %v63, 0.0
    %197 = vadd.xlane.f32.xlu0 %v196
    %v198 = vpop.xlane.xlu0 %197
    %v199 = vsel %vm93, %v64, 0.0
    %200 = vadd.xlane.f32.xlu0 %v199
    %v201 = vpop.xlane.xlu0 %200
    %v202 = vsel %vm93, %v65, 0.0
    %203 = vadd.xlane.f32.xlu0 %v202
    %v204 = vpop.xlane.xlu0 %203
    %v205 = vsel %vm93, %v66, 0.0
    %206 = vadd.xlane.f32.xlu0 %v205
    %v207 = vpop.xlane.xlu0 %206
    %v208 = vsel %vm93, %v67, 0.0
    %209 = vadd.xlane.f32.xlu0 %v208
    %v210 = vpop.xlane.xlu0 %209
    %v211 = vsel %vm93, %v68, 0.0
    %212 = vadd.xlane.f32.xlu0 %v211
    %v213 = vpop.xlane.xlu0 %212
    %v214 = vsel %vm93, %v69, 0.0
    %215 = vadd.xlane.f32.xlu0 %v214
    %v216 = vpop.xlane.xlu0 %215
    %v217 = vsel %vm93, %v70, 0.0
    %218 = vadd.xlane.f32.xlu0 %v217
    %v219 = vpop.xlane.xlu0 %218
    %v220 = vsel %vm93, %v71, 0.0
    %221 = vadd.xlane.f32.xlu0 %v220
    %v222 = vpop.xlane.xlu0 %221
    %v223 = vsel %vm93, %v72, 0.0
    %224 = vadd.xlane.f32.xlu0 %v223
    %v225 = vpop.xlane.xlu0 %224
    %v226 = vsel %vm93, %v73, 0.0
    %227 = vadd.xlane.f32.xlu0 %v226
    %v228 = vpop.xlane.xlu0 %227
    %v229 = vsel %vm93, %v74, 0.0
    %230 = vadd.xlane.f32.xlu0 %v229
    %v231 = vpop.xlane.xlu0 %230
    %v232 = vsel %vm93, %v75, 0.0
    %233 = vadd.xlane.f32.xlu0 %v232
    %v234 = vpop.xlane.xlu0 %233
    %v235 = vsel %vm93, %v76, 0.0
    %236 = vadd.xlane.f32.xlu0 %v235
    %v237 = vpop.xlane.xlu0 %236
    %v238 = vsel %vm93, %v77, 0.0
    %239 = vadd.xlane.f32.xlu0 %v238
    %v240 = vpop.xlane.xlu0 %239
    %v241 = vsel %vm93, %v78, 0.0
    %242 = vadd.xlane.f32.xlu0 %v241
    %v243 = vpop.xlane.xlu0 %242
    %v244 = vsel %vm93, %v79, 0.0
    %245 = vadd.xlane.f32.xlu0 %v244
    %v246 = vpop.xlane.xlu0 %245
    %v247 = vsel %vm93, %v80, 0.0
    %248 = vadd.xlane.f32.xlu0 %v247
    %v249 = vpop.xlane.xlu0 %248
    %v250 = vsel %vm93, %v81, 0.0
    %251 = vadd.xlane.f32.xlu0 %v250
    %v252 = vpop.xlane.xlu0 %251
    %v253 = vsel %vm93, %v82, 0.0
    %254 = vadd.xlane.f32.xlu0 %v253
    %v255 = vpop.xlane.xlu0 %254
    %v256 = vsel %vm93, %v83, 0.0
    %257 = vadd.xlane.f32.xlu0 %v256
    %v258 = vpop.xlane.xlu0 %257
    %v259 = vsel %vm93, %v84, 0.0
    %260 = vadd.xlane.f32.xlu0 %v259
    %v261 = vpop.xlane.xlu0 %260
    %v262 = vsel %vm93, %v85, 0.0
    %263 = vadd.xlane.f32.xlu0 %v262
    %v264 = vpop.xlane.xlu0 %263
    %v265 = vsel %vm93, %v86, 0.0
    %266 = vadd.xlane.f32.xlu0 %v265
    %v267 = vpop.xlane.xlu0 %266
    %v268 = vsel %vm93, %v87, 0.0
    %269 = vadd.xlane.f32.xlu0 %v268
    %v270 = vpop.xlane.xlu0 %269
    %v271 = vsel %vm93, %v88, 0.0
    %272 = vadd.xlane.f32.xlu0 %v271
    %v273 = vpop.xlane.xlu0 %272
    %v274 = vsel %vm93, %v89, 0.0
    %275 = vadd.xlane.f32.xlu0 %v274
    %v276 = vpop.xlane.xlu0 %275
    %v277 = vsel %vm93, %v90, 0.0
    %278 = vadd.xlane.f32.xlu0 %v277
    %v279 = vpop.xlane.xlu0 %278
    %v280 = vsel %vm93, %v91, 0.0
    %281 = vadd.xlane.f32.xlu0 %v280
    %v282 = vpop.xlane.xlu0 %281
    %v283 = vsel %vm93, %v92, 0.0
    %284 = vadd.xlane.f32.xlu0 %v283
    %v285 = vpop.xlane.xlu0 %284
    %v286 = vrcp.pop 64.0
    %v287 = vmul.f32 %v96, %v286
    %v288 = vmul.f32 %v99, %v286
    %v289 = vmul.f32 %v102, %v286
    %v290 = vmul.f32 %v105, %v286
    %v291 = vmul.f32 %v108, %v286
    %v292 = vmul.f32 %v111, %v286
    %v293 = vmul.f32 %v114, %v286
    %v294 = vmul.f32 %v117, %v286
    %v295 = vmul.f32 %v120, %v286
    %v296 = vmul.f32 %v123, %v286
    %v297 = vmul.f32 %v126, %v286
    %v298 = vmul.f32 %v129, %v286
    %v299 = vmul.f32 %v132, %v286
    %v300 = vmul.f32 %v135, %v286
    %v301 = vmul.f32 %v138, %v286
    %v302 = vmul.f32 %v141, %v286
    %v303 = vmul.f32 %v144, %v286
    %v304 = vmul.f32 %v147, %v286
    %v305 = vmul.f32 %v150, %v286
    %v306 = vmul.f32 %v153, %v286
    %v307 = vmul.f32 %v156, %v286
    %v308 = vmul.f32 %v159, %v286
    %v309 = vmul.f32 %v162, %v286
    %v310 = vmul.f32 %v165, %v286
    %v311 = vmul.f32 %v168, %v286
    %v312 = vmul.f32 %v171, %v286
    %v313 = vmul.f32 %v174, %v286
    %v314 = vmul.f32 %v177, %v286
    %v315 = vmul.f32 %v180, %v286
    %v316 = vmul.f32 %v183, %v286
    %v317 = vmul.f32 %v186, %v286
    %v318 = vmul.f32 %v189, %v286
    %v319 = vmul.f32 %v192, %v286
    %v320 = vmul.f32 %v195, %v286
    %v321 = vmul.f32 %v198, %v286
    %v322 = vmul.f32 %v201, %v286
    %v323 = vmul.f32 %v204, %v286
    %v324 = vmul.f32 %v207, %v286
    %v325 = vmul.f32 %v210, %v286
    %v326 = vmul.f32 %v213, %v286
    %v327 = vmul.f32 %v216, %v286
    %v328 = vmul.f32 %v219, %v286
    %v329 = vmul.f32 %v222, %v286
    %v330 = vmul.f32 %v225, %v286
    %v331 = vmul.f32 %v228, %v286
    %v332 = vmul.f32 %v231, %v286
    %v333 = vmul.f32 %v234, %v286
    %v334 = vmul.f32 %v237, %v286
    %v335 = vmul.f32 %v240, %v286
    %v336 = vmul.f32 %v243, %v286
    %v337 = vmul.f32 %v246, %v286
    %v338 = vmul.f32 %v249, %v286
    %v339 = vmul.f32 %v252, %v286
    %v340 = vmul.f32 %v255, %v286
    %v341 = vmul.f32 %v258, %v286
    %v342 = vmul.f32 %v261, %v286
    %v343 = vmul.f32 %v264, %v286
    %v344 = vmul.f32 %v267, %v286
    %v345 = vmul.f32 %v270, %v286
    %v346 = vmul.f32 %v273, %v286
    %v347 = vmul.f32 %v276, %v286
    %v348 = vmul.f32 %v279, %v286
    %v349 = vmul.f32 %v282, %v286
    %v350 = vmul.f32 %v285, %v286
    %v351 = vsub.f32 %v29, %v287
    %v352 = vsub.f32 %v30, %v288
    %v353 = vsub.f32 %v31, %v289
    %v354 = vsub.f32 %v32, %v290
    %v355 = vsub.f32 %v33, %v291
    %v356 = vsub.f32 %v34, %v292
    %v357 = vsub.f32 %v35, %v293
    %v358 = vsub.f32 %v36, %v294
    %v359 = vsub.f32 %v37, %v295
    %v360 = vsub.f32 %v38, %v296
    %v361 = vsub.f32 %v39, %v297
    %v362 = vsub.f32 %v40, %v298
    %v363 = vsub.f32 %v41, %v299
    %v364 = vsub.f32 %v42, %v300
    %v365 = vsub.f32 %v43, %v301
    %v366 = vsub.f32 %v44, %v302
    %v367 = vsub.f32 %v45, %v303
    %v368 = vsub.f32 %v46, %v304
    %v369 = vsub.f32 %v47, %v305
    %v370 = vsub.f32 %v48, %v306
    %v371 = vsub.f32 %v49, %v307
    %v372 = vsub.f32 %v50, %v308
    %v373 = vsub.f32 %v51, %v309
    %v374 = vsub.f32 %v52, %v310
    %v375 = vsub.f32 %v53, %v311
    %v376 = vsub.f32 %v54, %v312
    %v377 = vsub.f32 %v55, %v313
    %v378 = vsub.f32 %v56, %v314
    %v379 = vsub.f32 %v57, %v315
    %v380 = vsub.f32 %v58, %v316
    %v381 = vsub.f32 %v59, %v317
    %v382 = vsub.f32 %v60, %v318
    %v383 = vsub.f32 %v61, %v319
    %v384 = vsub.f32 %v62, %v320
    %v385 = vsub.f32 %v63, %v321
    %v386 = vsub.f32 %v64, %v322
    %v387 = vsub.f32 %v65, %v323
    %v388 = vsub.f32 %v66, %v324
    %v389 = vsub.f32 %v67, %v325
    %v390 = vsub.f32 %v68, %v326
    %v391 = vsub.f32 %v69, %v327
    %v392 = vsub.f32 %v70, %v328
    %v393 = vsub.f32 %v71, %v329
    %v394 = vsub.f32 %v72, %v330
    %v395 = vsub.f32 %v73, %v331
    %v396 = vsub.f32 %v74, %v332
    %v397 = vsub.f32 %v75, %v333
    %v398 = vsub.f32 %v76, %v334
    %v399 = vsub.f32 %v77, %v335
    %v400 = vsub.f32 %v78, %v336
    %v401 = vsub.f32 %v79, %v337
    %v402 = vsub.f32 %v80, %v338
    %v403 = vsub.f32 %v81, %v339
    %v404 = vsub.f32 %v82, %v340
    %v405 = vsub.f32 %v83, %v341
    %v406 = vsub.f32 %v84, %v342
    %v407 = vsub.f32 %v85, %v343
    %v408 = vsub.f32 %v86, %v344
    %v409 = vsub.f32 %v87, %v345
    %v410 = vsub.f32 %v88, %v346
    %v411 = vsub.f32 %v89, %v347
    %v412 = vsub.f32 %v90, %v348
    %v413 = vsub.f32 %v91, %v349
    %v414 = vsub.f32 %v92, %v350
    %v415 = vmul.f32 %v351, %v351
    %v416 = vmul.f32 %v352, %v352
    %v417 = vmul.f32 %v353, %v353
    %v418 = vmul.f32 %v354, %v354
    %v419 = vmul.f32 %v355, %v355
    %v420 = vmul.f32 %v356, %v356
    %v421 = vmul.f32 %v357, %v357
    %v422 = vmul.f32 %v358, %v358
    %v423 = vmul.f32 %v359, %v359
    %v424 = vmul.f32 %v360, %v360
    %v425 = vmul.f32 %v361, %v361
    %v426 = vmul.f32 %v362, %v362
    %v427 = vmul.f32 %v363, %v363
    %v428 = vmul.f32 %v364, %v364
    %v429 = vmul.f32 %v365, %v365
    %v430 = vmul.f32 %v366, %v366
    %v431 = vmul.f32 %v367, %v367
    %v432 = vmul.f32 %v368, %v368
    %v433 = vmul.f32 %v369, %v369
    %v434 = vmul.f32 %v370, %v370
    %v435 = vmul.f32 %v371, %v371
    %v436 = vmul.f32 %v372, %v372
    %v437 = vmul.f32 %v373, %v373
    %v438 = vmul.f32 %v374, %v374
    %v439 = vmul.f32 %v375, %v375
    %v440 = vmul.f32 %v376, %v376
    %v441 = vmul.f32 %v377, %v377
    %v442 = vmul.f32 %v378, %v378
    %v443 = vmul.f32 %v379, %v379
    %v444 = vmul.f32 %v380, %v380
    %v445 = vmul.f32 %v381, %v381
    %v446 = vmul.f32 %v382, %v382
    %v447 = vmul.f32 %v383, %v383
    %v448 = vmul.f32 %v384, %v384
    %v449 = vmul.f32 %v385, %v385
    %v450 = vmul.f32 %v386, %v386
    %v451 = vmul.f32 %v387, %v387
    %v452 = vmul.f32 %v388, %v388
    %v453 = vmul.f32 %v389, %v389
    %v454 = vmul.f32 %v390, %v390
    %v455 = vmul.f32 %v391, %v391
    %v456 = vmul.f32 %v392, %v392
    %v457 = vmul.f32 %v393, %v393
    %v458 = vmul.f32 %v394, %v394
    %v459 = vmul.f32 %v395, %v395
    %v460 = vmul.f32 %v396, %v396
    %v461 = vmul.f32 %v397, %v397
    %v462 = vmul.f32 %v398, %v398
    %v463 = vmul.f32 %v399, %v399
    %v464 = vmul.f32 %v400, %v400
    %v465 = vmul.f32 %v401, %v401
    %v466 = vmul.f32 %v402, %v402
    %v467 = vmul.f32 %v403, %v403
    %v468 = vmul.f32 %v404, %v404
    %v469 = vmul.f32 %v405, %v405
    %v470 = vmul.f32 %v406, %v406
    %v471 = vmul.f32 %v407, %v407
    %v472 = vmul.f32 %v408, %v408
    %v473 = vmul.f32 %v409, %v409
    %v474 = vmul.f32 %v410, %v410
    %v475 = vmul.f32 %v411, %v411
    %v476 = vmul.f32 %v412, %v412
    %v477 = vmul.f32 %v413, %v413
    %v478 = vmul.f32 %v414, %v414
    %v479 = vsel %vm93, %v415, 0.0
    %480 = vadd.xlane.f32.xlu0 %v479
    %v481 = vpop.xlane.xlu0 %480
    %v482 = vsel %vm93, %v416, 0.0
    %483 = vadd.xlane.f32.xlu0 %v482
    %v484 = vpop.xlane.xlu0 %483
    %v485 = vsel %vm93, %v417, 0.0
    %486 = vadd.xlane.f32.xlu0 %v485
    %v487 = vpop.xlane.xlu0 %486
    %v488 = vsel %vm93, %v418, 0.0
    %489 = vadd.xlane.f32.xlu0 %v488
    %v490 = vpop.xlane.xlu0 %489
    %v491 = vsel %vm93, %v419, 0.0
    %492 = vadd.xlane.f32.xlu0 %v491
    %v493 = vpop.xlane.xlu0 %492
    %v494 = vsel %vm93, %v420, 0.0
    %495 = vadd.xlane.f32.xlu0 %v494
    %v496 = vpop.xlane.xlu0 %495
    %v497 = vsel %vm93, %v421, 0.0
    %498 = vadd.xlane.f32.xlu0 %v497
    %v499 = vpop.xlane.xlu0 %498
    %v500 = vsel %vm93, %v422, 0.0
    %501 = vadd.xlane.f32.xlu0 %v500
    %v502 = vpop.xlane.xlu0 %501
    %v503 = vsel %vm93, %v423, 0.0
    %504 = vadd.xlane.f32.xlu0 %v503
    %v505 = vpop.xlane.xlu0 %504
    %v506 = vsel %vm93, %v424, 0.0
    %507 = vadd.xlane.f32.xlu0 %v506
    %v508 = vpop.xlane.xlu0 %507
    %v509 = vsel %vm93, %v425, 0.0
    %510 = vadd.xlane.f32.xlu0 %v509
    %v511 = vpop.xlane.xlu0 %510
    %v512 = vsel %vm93, %v426, 0.0
    %513 = vadd.xlane.f32.xlu0 %v512
    %v514 = vpop.xlane.xlu0 %513
    %v515 = vsel %vm93, %v427, 0.0
    %516 = vadd.xlane.f32.xlu0 %v515
    %v517 = vpop.xlane.xlu0 %516
    %v518 = vsel %vm93, %v428, 0.0
    %519 = vadd.xlane.f32.xlu0 %v518
    %v520 = vpop.xlane.xlu0 %519
    %v521 = vsel %vm93, %v429, 0.0
    %522 = vadd.xlane.f32.xlu0 %v521
    %v523 = vpop.xlane.xlu0 %522
    %v524 = vsel %vm93, %v430, 0.0
    %525 = vadd.xlane.f32.xlu0 %v524
    %v526 = vpop.xlane.xlu0 %525
    %v527 = vsel %vm93, %v431, 0.0
    %528 = vadd.xlane.f32.xlu0 %v527
    %v529 = vpop.xlane.xlu0 %528
    %v530 = vsel %vm93, %v432, 0.0
    %531 = vadd.xlane.f32.xlu0 %v530
    %v532 = vpop.xlane.xlu0 %531
    %v533 = vsel %vm93, %v433, 0.0
    %534 = vadd.xlane.f32.xlu0 %v533
    %v535 = vpop.xlane.xlu0 %534
    %v536 = vsel %vm93, %v434, 0.0
    %537 = vadd.xlane.f32.xlu0 %v536
    %v538 = vpop.xlane.xlu0 %537
    %v539 = vsel %vm93, %v435, 0.0
    %540 = vadd.xlane.f32.xlu0 %v539
    %v541 = vpop.xlane.xlu0 %540
    %v542 = vsel %vm93, %v436, 0.0
    %543 = vadd.xlane.f32.xlu0 %v542
    %v544 = vpop.xlane.xlu0 %543
    %v545 = vsel %vm93, %v437, 0.0
    %546 = vadd.xlane.f32.xlu0 %v545
    %v547 = vpop.xlane.xlu0 %546
    %v548 = vsel %vm93, %v438, 0.0
    %549 = vadd.xlane.f32.xlu0 %v548
    %v550 = vpop.xlane.xlu0 %549
    %v551 = vsel %vm93, %v439, 0.0
    %552 = vadd.xlane.f32.xlu0 %v551
    %v553 = vpop.xlane.xlu0 %552
    %v554 = vsel %vm93, %v440, 0.0
    %555 = vadd.xlane.f32.xlu0 %v554
    %v556 = vpop.xlane.xlu0 %555
    %v557 = vsel %vm93, %v441, 0.0
    %558 = vadd.xlane.f32.xlu0 %v557
    %v559 = vpop.xlane.xlu0 %558
    %v560 = vsel %vm93, %v442, 0.0
    %561 = vadd.xlane.f32.xlu0 %v560
    %v562 = vpop.xlane.xlu0 %561
    %v563 = vsel %vm93, %v443, 0.0
    %564 = vadd.xlane.f32.xlu0 %v563
    %v565 = vpop.xlane.xlu0 %564
    %v566 = vsel %vm93, %v444, 0.0
    %567 = vadd.xlane.f32.xlu0 %v566
    %v568 = vpop.xlane.xlu0 %567
    %v569 = vsel %vm93, %v445, 0.0
    %570 = vadd.xlane.f32.xlu0 %v569
    %v571 = vpop.xlane.xlu0 %570
    %v572 = vsel %vm93, %v446, 0.0
    %573 = vadd.xlane.f32.xlu0 %v572
    %v574 = vpop.xlane.xlu0 %573
    %v575 = vsel %vm93, %v447, 0.0
    %576 = vadd.xlane.f32.xlu0 %v575
    %v577 = vpop.xlane.xlu0 %576
    %v578 = vsel %vm93, %v448, 0.0
    %579 = vadd.xlane.f32.xlu0 %v578
    %v580 = vpop.xlane.xlu0 %579
    %v581 = vsel %vm93, %v449, 0.0
    %582 = vadd.xlane.f32.xlu0 %v581
    %v583 = vpop.xlane.xlu0 %582
    %v584 = vsel %vm93, %v450, 0.0
    %585 = vadd.xlane.f32.xlu0 %v584
    %v586 = vpop.xlane.xlu0 %585
    %v587 = vsel %vm93, %v451, 0.0
    %588 = vadd.xlane.f32.xlu0 %v587
    %v589 = vpop.xlane.xlu0 %588
    %v590 = vsel %vm93, %v452, 0.0
    %591 = vadd.xlane.f32.xlu0 %v590
    %v592 = vpop.xlane.xlu0 %591
    %v593 = vsel %vm93, %v453, 0.0
    %594 = vadd.xlane.f32.xlu0 %v593
    %v595 = vpop.xlane.xlu0 %594
    %v596 = vsel %vm93, %v454, 0.0
    %597 = vadd.xlane.f32.xlu0 %v596
    %v598 = vpop.xlane.xlu0 %597
    %v599 = vsel %vm93, %v455, 0.0
    %600 = vadd.xlane.f32.xlu0 %v599
    %v601 = vpop.xlane.xlu0 %600
    %v602 = vsel %vm93, %v456, 0.0
    %603 = vadd.xlane.f32.xlu0 %v602
    %v604 = vpop.xlane.xlu0 %603
    %v605 = vsel %vm93, %v457, 0.0
    %606 = vadd.xlane.f32.xlu0 %v605
    %v607 = vpop.xlane.xlu0 %606
    %v608 = vsel %vm93, %v458, 0.0
    %609 = vadd.xlane.f32.xlu0 %v608
    %v610 = vpop.xlane.xlu0 %609
    %v611 = vsel %vm93, %v459, 0.0
    %612 = vadd.xlane.f32.xlu0 %v611
    %v613 = vpop.xlane.xlu0 %612
    %v614 = vsel %vm93, %v460, 0.0
    %615 = vadd.xlane.f32.xlu0 %v614
    %v616 = vpop.xlane.xlu0 %615
    %v617 = vsel %vm93, %v461, 0.0
    %618 = vadd.xlane.f32.xlu0 %v617
    %v619 = vpop.xlane.xlu0 %618
    %v620 = vsel %vm93, %v462, 0.0
    %621 = vadd.xlane.f32.xlu0 %v620
    %v622 = vpop.xlane.xlu0 %621
    %v623 = vsel %vm93, %v463, 0.0
    %624 = vadd.xlane.f32.xlu0 %v623
    %v625 = vpop.xlane.xlu0 %624
    %v626 = vsel %vm93, %v464, 0.0
    %627 = vadd.xlane.f32.xlu0 %v626
    %v628 = vpop.xlane.xlu0 %627
    %v629 = vsel %vm93, %v465, 0.0
    %630 = vadd.xlane.f32.xlu0 %v629
    %v631 = vpop.xlane.xlu0 %630
    %v632 = vsel %vm93, %v466, 0.0
    %633 = vadd.xlane.f32.xlu0 %v632
    %v634 = vpop.xlane.xlu0 %633
    %v635 = vsel %vm93, %v467, 0.0
    %636 = vadd.xlane.f32.xlu0 %v635
    %v637 = vpop.xlane.xlu0 %636
    %v638 = vsel %vm93, %v468, 0.0
    %639 = vadd.xlane.f32.xlu0 %v638
    %v640 = vpop.xlane.xlu0 %639
    %v641 = vsel %vm93, %v469, 0.0
    %642 = vadd.xlane.f32.xlu0 %v641
    %v643 = vpop.xlane.xlu0 %642
    %v644 = vsel %vm93, %v470, 0.0
    %645 = vadd.xlane.f32.xlu0 %v644
    %v646 = vpop.xlane.xlu0 %645
    %v647 = vsel %vm93, %v471, 0.0
    %648 = vadd.xlane.f32.xlu0 %v647
    %v649 = vpop.xlane.xlu0 %648
    %v650 = vsel %vm93, %v472, 0.0
    %651 = vadd.xlane.f32.xlu0 %v650
    %v652 = vpop.xlane.xlu0 %651
    %v653 = vsel %vm93, %v473, 0.0
    %654 = vadd.xlane.f32.xlu0 %v653
    %v655 = vpop.xlane.xlu0 %654
    %v656 = vsel %vm93, %v474, 0.0
    %657 = vadd.xlane.f32.xlu0 %v656
    %v658 = vpop.xlane.xlu0 %657
    %v659 = vsel %vm93, %v475, 0.0
    %660 = vadd.xlane.f32.xlu0 %v659
    %v661 = vpop.xlane.xlu0 %660
    %v662 = vsel %vm93, %v476, 0.0
    %663 = vadd.xlane.f32.xlu0 %v662
    %v664 = vpop.xlane.xlu0 %663
    %v665 = vsel %vm93, %v477, 0.0
    %666 = vadd.xlane.f32.xlu0 %v665
    %v667 = vpop.xlane.xlu0 %666
    %v668 = vsel %vm93, %v478, 0.0
    %669 = vadd.xlane.f32.xlu0 %v668
    %v670 = vpop.xlane.xlu0 %669
    %v671 = vmul.f32 %v481, %v286
    %v672 = vmul.f32 %v484, %v286
    %v673 = vmul.f32 %v487, %v286
    %v674 = vmul.f32 %v490, %v286
    %v675 = vmul.f32 %v493, %v286
    %v676 = vmul.f32 %v496, %v286
    %v677 = vmul.f32 %v499, %v286
    %v678 = vmul.f32 %v502, %v286
    %v679 = vmul.f32 %v505, %v286
    %v680 = vmul.f32 %v508, %v286
    %v681 = vmul.f32 %v511, %v286
    %v682 = vmul.f32 %v514, %v286
    %v683 = vmul.f32 %v517, %v286
    %v684 = vmul.f32 %v520, %v286
    %v685 = vmul.f32 %v523, %v286
    %v686 = vmul.f32 %v526, %v286
    %v687 = vmul.f32 %v529, %v286
    %v688 = vmul.f32 %v532, %v286
    %v689 = vmul.f32 %v535, %v286
    %v690 = vmul.f32 %v538, %v286
    %v691 = vmul.f32 %v541, %v286
    %v692 = vmul.f32 %v544, %v286
    %v693 = vmul.f32 %v547, %v286
    %v694 = vmul.f32 %v550, %v286
    %v695 = vmul.f32 %v553, %v286
    %v696 = vmul.f32 %v556, %v286
    %v697 = vmul.f32 %v559, %v286
    %v698 = vmul.f32 %v562, %v286
    %v699 = vmul.f32 %v565, %v286
    %v700 = vmul.f32 %v568, %v286
    %v701 = vmul.f32 %v571, %v286
    %v702 = vmul.f32 %v574, %v286
    %v703 = vmul.f32 %v577, %v286
    %v704 = vmul.f32 %v580, %v286
    %v705 = vmul.f32 %v583, %v286
    %v706 = vmul.f32 %v586, %v286
    %v707 = vmul.f32 %v589, %v286
    %v708 = vmul.f32 %v592, %v286
    %v709 = vmul.f32 %v595, %v286
    %v710 = vmul.f32 %v598, %v286
    %v711 = vmul.f32 %v601, %v286
    %v712 = vmul.f32 %v604, %v286
    %v713 = vmul.f32 %v607, %v286
    %v714 = vmul.f32 %v610, %v286
    %v715 = vmul.f32 %v613, %v286
    %v716 = vmul.f32 %v616, %v286
    %v717 = vmul.f32 %v619, %v286
    %v718 = vmul.f32 %v622, %v286
    %v719 = vmul.f32 %v625, %v286
    %v720 = vmul.f32 %v628, %v286
    %v721 = vmul.f32 %v631, %v286
    %v722 = vmul.f32 %v634, %v286
    %v723 = vmul.f32 %v637, %v286
    %v724 = vmul.f32 %v640, %v286
    %v725 = vmul.f32 %v643, %v286
    %v726 = vmul.f32 %v646, %v286
    %v727 = vmul.f32 %v649, %v286
    %v728 = vmul.f32 %v652, %v286
    %v729 = vmul.f32 %v655, %v286
    %v730 = vmul.f32 %v658, %v286
    %v731 = vmul.f32 %v661, %v286
    %v732 = vmul.f32 %v664, %v286
    %v733 = vmul.f32 %v667, %v286
    %v734 = vmul.f32 %v670, %v286
    %v735 = vadd.f32 %v671, 1e-05
    %v736 = vadd.f32 %v672, 1e-05
    %v737 = vadd.f32 %v673, 1e-05
    %v738 = vadd.f32 %v674, 1e-05
    %v739 = vadd.f32 %v675, 1e-05
    %v740 = vadd.f32 %v676, 1e-05
    %v741 = vadd.f32 %v677, 1e-05
    %v742 = vadd.f32 %v678, 1e-05
    %v743 = vadd.f32 %v679, 1e-05
    %v744 = vadd.f32 %v680, 1e-05
    %v745 = vadd.f32 %v681, 1e-05
    %v746 = vadd.f32 %v682, 1e-05
    %v747 = vadd.f32 %v683, 1e-05
    %v748 = vadd.f32 %v684, 1e-05
    %v749 = vadd.f32 %v685, 1e-05
    %v750 = vadd.f32 %v686, 1e-05
    %v751 = vadd.f32 %v687, 1e-05
    %v752 = vadd.f32 %v688, 1e-05
    %v753 = vadd.f32 %v689, 1e-05
    %v754 = vadd.f32 %v690, 1e-05
    %v755 = vadd.f32 %v691, 1e-05
    %v756 = vadd.f32 %v692, 1e-05
    %v757 = vadd.f32 %v693, 1e-05
    %v758 = vadd.f32 %v694, 1e-05
    %v759 = vadd.f32 %v695, 1e-05
    %v760 = vadd.f32 %v696, 1e-05
    %v761 = vadd.f32 %v697, 1e-05
    %v762 = vadd.f32 %v698, 1e-05
    %v763 = vadd.f32 %v699, 1e-05
    %v764 = vadd.f32 %v700, 1e-05
    %v765 = vadd.f32 %v701, 1e-05
    %v766 = vadd.f32 %v702, 1e-05
    %v767 = vadd.f32 %v703, 1e-05
    %v768 = vadd.f32 %v704, 1e-05
    %v769 = vadd.f32 %v705, 1e-05
    %v770 = vadd.f32 %v706, 1e-05
    %v771 = vadd.f32 %v707, 1e-05
    %v772 = vadd.f32 %v708, 1e-05
    %v773 = vadd.f32 %v709, 1e-05
    %v774 = vadd.f32 %v710, 1e-05
    %v775 = vadd.f32 %v711, 1e-05
    %v776 = vadd.f32 %v712, 1e-05
    %v777 = vadd.f32 %v713, 1e-05
    %v778 = vadd.f32 %v714, 1e-05
    %v779 = vadd.f32 %v715, 1e-05
    %v780 = vadd.f32 %v716, 1e-05
    %v781 = vadd.f32 %v717, 1e-05
    %v782 = vadd.f32 %v718, 1e-05
    %v783 = vadd.f32 %v719, 1e-05
    %v784 = vadd.f32 %v720, 1e-05
    %v785 = vadd.f32 %v721, 1e-05
    %v786 = vadd.f32 %v722, 1e-05
    %v787 = vadd.f32 %v723, 1e-05
    %v788 = vadd.f32 %v724, 1e-05
    %v789 = vadd.f32 %v725, 1e-05
    %v790 = vadd.f32 %v726, 1e-05
    %v791 = vadd.f32 %v727, 1e-05
    %v792 = vadd.f32 %v728, 1e-05
    %v793 = vadd.f32 %v729, 1e-05
    %v794 = vadd.f32 %v730, 1e-05
    %v795 = vadd.f32 %v731, 1e-05
    %v796 = vadd.f32 %v732, 1e-05
    %v797 = vadd.f32 %v733, 1e-05
    %v798 = vadd.f32 %v734, 1e-05
    %v799 = vrsqrt.pop %v735
    %v800 = vrsqrt.pop %v736
    %v801 = vrsqrt.pop %v737
    %v802 = vrsqrt.pop %v738
    %v803 = vrsqrt.pop %v739
    %v804 = vrsqrt.pop %v740
    %v805 = vrsqrt.pop %v741
    %v806 = vrsqrt.pop %v742
    %v807 = vrsqrt.pop %v743
    %v808 = vrsqrt.pop %v744
    %v809 = vrsqrt.pop %v745
    %v810 = vrsqrt.pop %v746
    %v811 = vrsqrt.pop %v747
    %v812 = vrsqrt.pop %v748
    %v813 = vrsqrt.pop %v749
    %v814 = vrsqrt.pop %v750
    %v815 = vrsqrt.pop %v751
    %v816 = vrsqrt.pop %v752
    %v817 = vrsqrt.pop %v753
    %v818 = vrsqrt.pop %v754
    %v819 = vrsqrt.pop %v755
    %v820 = vrsqrt.pop %v756
    %v821 = vrsqrt.pop %v757
    %v822 = vrsqrt.pop %v758
    %v823 = vrsqrt.pop %v759
    %v824 = vrsqrt.pop %v760
    %v825 = vrsqrt.pop %v761
    %v826 = vrsqrt.pop %v762
    %v827 = vrsqrt.pop %v763
    %v828 = vrsqrt.pop %v764
    %v829 = vrsqrt.pop %v765
    %v830 = vrsqrt.pop %v766
    %v831 = vrsqrt.pop %v767
    %v832 = vrsqrt.pop %v768
    %v833 = vrsqrt.pop %v769
    %v834 = vrsqrt.pop %v770
    %v835 = vrsqrt.pop %v771
    %v836 = vrsqrt.pop %v772
    %v837 = vrsqrt.pop %v773
    %v838 = vrsqrt.pop %v774
    %v839 = vrsqrt.pop %v775
    %v840 = vrsqrt.pop %v776
    %v841 = vrsqrt.pop %v777
    %v842 = vrsqrt.pop %v778
    %v843 = vrsqrt.pop %v779
    %v844 = vrsqrt.pop %v780
    %v845 = vrsqrt.pop %v781
    %v846 = vrsqrt.pop %v782
    %v847 = vrsqrt.pop %v783
    %v848 = vrsqrt.pop %v784
    %v849 = vrsqrt.pop %v785
    %v850 = vrsqrt.pop %v786
    %v851 = vrsqrt.pop %v787
    %v852 = vrsqrt.pop %v788
    %v853 = vrsqrt.pop %v789
    %v854 = vrsqrt.pop %v790
    %v855 = vrsqrt.pop %v791
    %v856 = vrsqrt.pop %v792
    %v857 = vrsqrt.pop %v793
    %v858 = vrsqrt.pop %v794
    %v859 = vrsqrt.pop %v795
    %v860 = vrsqrt.pop %v796
    %v861 = vrsqrt.pop %v797
    %v862 = vrsqrt.pop %v798
    %v863 = vmul.f32 %v351, %v799
    %v864 = vmul.f32 %v352, %v800
    %v865 = vmul.f32 %v353, %v801
    %v866 = vmul.f32 %v354, %v802
    %v867 = vmul.f32 %v355, %v803
    %v868 = vmul.f32 %v356, %v804
    %v869 = vmul.f32 %v357, %v805
    %v870 = vmul.f32 %v358, %v806
    %v871 = vmul.f32 %v359, %v807
    %v872 = vmul.f32 %v360, %v808
    %v873 = vmul.f32 %v361, %v809
    %v874 = vmul.f32 %v362, %v810
    %v875 = vmul.f32 %v363, %v811
    %v876 = vmul.f32 %v364, %v812
    %v877 = vmul.f32 %v365, %v813
    %v878 = vmul.f32 %v366, %v814
    %v879 = vmul.f32 %v367, %v815
    %v880 = vmul.f32 %v368, %v816
    %v881 = vmul.f32 %v369, %v817
    %v882 = vmul.f32 %v370, %v818
    %v883 = vmul.f32 %v371, %v819
    %v884 = vmul.f32 %v372, %v820
    %v885 = vmul.f32 %v373, %v821
    %v886 = vmul.f32 %v374, %v822
    %v887 = vmul.f32 %v375, %v823
    %v888 = vmul.f32 %v376, %v824
    %v889 = vmul.f32 %v377, %v825
    %v890 = vmul.f32 %v378, %v826
    %v891 = vmul.f32 %v379, %v827
    %v892 = vmul.f32 %v380, %v828
    %v893 = vmul.f32 %v381, %v829
    %v894 = vmul.f32 %v382, %v830
    %v895 = vmul.f32 %v383, %v831
    %v896 = vmul.f32 %v384, %v832
    %v897 = vmul.f32 %v385, %v833
    %v898 = vmul.f32 %v386, %v834
    %v899 = vmul.f32 %v387, %v835
    %v900 = vmul.f32 %v388, %v836
    %v901 = vmul.f32 %v389, %v837
    %v902 = vmul.f32 %v390, %v838
    %v903 = vmul.f32 %v391, %v839
    %v904 = vmul.f32 %v392, %v840
    %v905 = vmul.f32 %v393, %v841
    %v906 = vmul.f32 %v394, %v842
    %v907 = vmul.f32 %v395, %v843
    %v908 = vmul.f32 %v396, %v844
    %v909 = vmul.f32 %v397, %v845
    %v910 = vmul.f32 %v398, %v846
    %v911 = vmul.f32 %v399, %v847
    %v912 = vmul.f32 %v400, %v848
    %v913 = vmul.f32 %v401, %v849
    %v914 = vmul.f32 %v402, %v850
    %v915 = vmul.f32 %v403, %v851
    %v916 = vmul.f32 %v404, %v852
    %v917 = vmul.f32 %v405, %v853
    %v918 = vmul.f32 %v406, %v854
    %v919 = vmul.f32 %v407, %v855
    %v920 = vmul.f32 %v408, %v856
    %v921 = vmul.f32 %v409, %v857
    %v922 = vmul.f32 %v410, %v858
    %v923 = vmul.f32 %v411, %v859
    %v924 = vmul.f32 %v412, %v860
    %v925 = vmul.f32 %v413, %v861
    %v926 = vmul.f32 %v414, %v862
    %v927 = vld [vmem:[%s1] sm:$0x1]
    %v929 = vlaneseq
    %v930 = vshrl.u32 %v929, 7
    %v931 = vsub.s32 0, %v930
    %v932 = vrot.slane %v927, %v931
    %v934 = vmul.f32 %v863, %v932
    %v935 = vmul.f32 %v864, %v932
    %v936 = vmul.f32 %v865, %v932
    %v937 = vmul.f32 %v866, %v932
    %v938 = vmul.f32 %v867, %v932
    %v939 = vmul.f32 %v868, %v932
    %v940 = vmul.f32 %v869, %v932
    %v941 = vmul.f32 %v870, %v932
    %v942 = vmul.f32 %v871, %v932
    %v943 = vmul.f32 %v872, %v932
    %v944 = vmul.f32 %v873, %v932
    %v945 = vmul.f32 %v874, %v932
    %v946 = vmul.f32 %v875, %v932
    %v947 = vmul.f32 %v876, %v932
    %v948 = vmul.f32 %v877, %v932
    %v949 = vmul.f32 %v878, %v932
    %v950 = vmul.f32 %v879, %v932
    %v951 = vmul.f32 %v880, %v932
    %v952 = vmul.f32 %v881, %v932
    %v953 = vmul.f32 %v882, %v932
    %v954 = vmul.f32 %v883, %v932
    %v955 = vmul.f32 %v884, %v932
    %v956 = vmul.f32 %v885, %v932
    %v957 = vmul.f32 %v886, %v932
    %v958 = vmul.f32 %v887, %v932
    %v959 = vmul.f32 %v888, %v932
    %v960 = vmul.f32 %v889, %v932
    %v961 = vmul.f32 %v890, %v932
    %v962 = vmul.f32 %v891, %v932
    %v963 = vmul.f32 %v892, %v932
    %v964 = vmul.f32 %v893, %v932
    %v965 = vmul.f32 %v894, %v932
    %v966 = vmul.f32 %v895, %v932
    %v967 = vmul.f32 %v896, %v932
    %v968 = vmul.f32 %v897, %v932
    %v969 = vmul.f32 %v898, %v932
    %v970 = vmul.f32 %v899, %v932
    %v971 = vmul.f32 %v900, %v932
    %v972 = vmul.f32 %v901, %v932
    %v973 = vmul.f32 %v902, %v932
    %v974 = vmul.f32 %v903, %v932
    %v975 = vmul.f32 %v904, %v932
    %v976 = vmul.f32 %v905, %v932
    %v977 = vmul.f32 %v906, %v932
    %v978 = vmul.f32 %v907, %v932
    %v979 = vmul.f32 %v908, %v932
    %v980 = vmul.f32 %v909, %v932
    %v981 = vmul.f32 %v910, %v932
    %v982 = vmul.f32 %v911, %v932
    %v983 = vmul.f32 %v912, %v932
    %v984 = vmul.f32 %v913, %v932
    %v985 = vmul.f32 %v914, %v932
    %v986 = vmul.f32 %v915, %v932
    %v987 = vmul.f32 %v916, %v932
    %v988 = vmul.f32 %v917, %v932
    %v989 = vmul.f32 %v918, %v932
    %v990 = vmul.f32 %v919, %v932
    %v991 = vmul.f32 %v920, %v932
    %v992 = vmul.f32 %v921, %v932
    %v993 = vmul.f32 %v922, %v932
    %v994 = vmul.f32 %v923, %v932
    %v995 = vmul.f32 %v924, %v932
    %v996 = vmul.f32 %v925, %v932
    %v997 = vmul.f32 %v926, %v932
    %v998 = vld [vmem:[%s2] sm:$0x1]
    %v1000 = vlaneseq
    %v1001 = vshrl.u32 %v1000, 7
    %v1002 = vsub.s32 0, %v1001
    %v1003 = vrot.slane %v998, %v1002
    %v1005 = vadd.f32 %v934, %v1003
    %v1006 = vadd.f32 %v935, %v1003
    %v1007 = vadd.f32 %v936, %v1003
    %v1008 = vadd.f32 %v937, %v1003
    %v1009 = vadd.f32 %v938, %v1003
    %v1010 = vadd.f32 %v939, %v1003
    %v1011 = vadd.f32 %v940, %v1003
    %v1012 = vadd.f32 %v941, %v1003
    %v1013 = vadd.f32 %v942, %v1003
    %v1014 = vadd.f32 %v943, %v1003
    %v1015 = vadd.f32 %v944, %v1003
    %v1016 = vadd.f32 %v945, %v1003
    %v1017 = vadd.f32 %v946, %v1003
    %v1018 = vadd.f32 %v947, %v1003
    %v1019 = vadd.f32 %v948, %v1003
    %v1020 = vadd.f32 %v949, %v1003
    %v1021 = vadd.f32 %v950, %v1003
    %v1022 = vadd.f32 %v951, %v1003
    %v1023 = vadd.f32 %v952, %v1003
    %v1024 = vadd.f32 %v953, %v1003
    %v1025 = vadd.f32 %v954, %v1003
    %v1026 = vadd.f32 %v955, %v1003
    %v1027 = vadd.f32 %v956, %v1003
    %v1028 = vadd.f32 %v957, %v1003
    %v1029 = vadd.f32 %v958, %v1003
    %v1030 = vadd.f32 %v959, %v1003
    %v1031 = vadd.f32 %v960, %v1003
    %v1032 = vadd.f32 %v961, %v1003
    %v1033 = vadd.f32 %v962, %v1003
    %v1034 = vadd.f32 %v963, %v1003
    %v1035 = vadd.f32 %v964, %v1003
    %v1036 = vadd.f32 %v965, %v1003
    %v1037 = vadd.f32 %v966, %v1003
    %v1038 = vadd.f32 %v967, %v1003
    %v1039 = vadd.f32 %v968, %v1003
    %v1040 = vadd.f32 %v969, %v1003
    %v1041 = vadd.f32 %v970, %v1003
    %v1042 = vadd.f32 %v971, %v1003
    %v1043 = vadd.f32 %v972, %v1003
    %v1044 = vadd.f32 %v973, %v1003
    %v1045 = vadd.f32 %v974, %v1003
    %v1046 = vadd.f32 %v975, %v1003
    %v1047 = vadd.f32 %v976, %v1003
    %v1048 = vadd.f32 %v977, %v1003
    %v1049 = vadd.f32 %v978, %v1003
    %v1050 = vadd.f32 %v979, %v1003
    %v1051 = vadd.f32 %v980, %v1003
    %v1052 = vadd.f32 %v981, %v1003
    %v1053 = vadd.f32 %v982, %v1003
    %v1054 = vadd.f32 %v983, %v1003
    %v1055 = vadd.f32 %v984, %v1003
    %v1056 = vadd.f32 %v985, %v1003
    %v1057 = vadd.f32 %v986, %v1003
    %v1058 = vadd.f32 %v987, %v1003
    %v1059 = vadd.f32 %v988, %v1003
    %v1060 = vadd.f32 %v989, %v1003
    %v1061 = vadd.f32 %v990, %v1003
    %v1062 = vadd.f32 %v991, %v1003
    %v1063 = vadd.f32 %v992, %v1003
    %v1064 = vadd.f32 %v993, %v1003
    %v1065 = vadd.f32 %v994, %v1003
    %v1066 = vadd.f32 %v995, %v1003
    %v1067 = vadd.f32 %v996, %v1003
    %v1068 = vadd.f32 %v997, %v1003
    %1069 = vst.msk [vmem:[#allocation5] sm:$0xff] %vm93, %v1005
    %1070 = vst.msk [vmem:[#allocation5 + $0x8] sm:$0xff] %vm93, %v1006
    %1071 = vst.msk [vmem:[#allocation5 + $0x10] sm:$0xff] %vm93, %v1007
    %1072 = vst.msk [vmem:[#allocation5 + $0x18] sm:$0xff] %vm93, %v1008
    %1073 = vst.msk [vmem:[#allocation5 + $0x20] sm:$0xff] %vm93, %v1009
    %1074 = vst.msk [vmem:[#allocation5 + $0x28] sm:$0xff] %vm93, %v1010
    %1075 = vst.msk [vmem:[#allocation5 + $0x30] sm:$0xff] %vm93, %v1011
    %1076 = vst.msk [vmem:[#allocation5 + $0x38] sm:$0xff] %vm93, %v1012
    %1077 = vst.msk [vmem:[#allocation5 + $0x40] sm:$0xff] %vm93, %v1013
    %1078 = vst.msk [vmem:[#allocation5 + $0x48] sm:$0xff] %vm93, %v1014
    %1079 = vst.msk [vmem:[#allocation5 + $0x50] sm:$0xff] %vm93, %v1015
    %1080 = vst.msk [vmem:[#allocation5 + $0x58] sm:$0xff] %vm93, %v1016
    %1081 = vst.msk [vmem:[#allocation5 + $0x60] sm:$0xff] %vm93, %v1017
    %1082 = vst.msk [vmem:[#allocation5 + $0x68] sm:$0xff] %vm93, %v1018
    %1083 = vst.msk [vmem:[#allocation5 + $0x70] sm:$0xff] %vm93, %v1019
    %1084 = vst.msk [vmem:[#allocation5 + $0x78] sm:$0xff] %vm93, %v1020
    %1085 = vst.msk [vmem:[#allocation5 + $0x80] sm:$0xff] %vm93, %v1021
    %1086 = vst.msk [vmem:[#allocation5 + $0x88] sm:$0xff] %vm93, %v1022
    %1087 = vst.msk [vmem:[#allocation5 + $0x90] sm:$0xff] %vm93, %v1023
    %1088 = vst.msk [vmem:[#allocation5 + $0x98] sm:$0xff] %vm93, %v1024
    %1089 = vst.msk [vmem:[#allocation5 + $0xa0] sm:$0xff] %vm93, %v1025
    %1090 = vst.msk [vmem:[#allocation5 + $0xa8] sm:$0xff] %vm93, %v1026
    %1091 = vst.msk [vmem:[#allocation5 + $0xb0] sm:$0xff] %vm93, %v1027
    %1092 = vst.msk [vmem:[#allocation5 + $0xb8] sm:$0xff] %vm93, %v1028
    %1093 = vst.msk [vmem:[#allocation5 + $0xc0] sm:$0xff] %vm93, %v1029
    %1094 = vst.msk [vmem:[#allocation5 + $0xc8] sm:$0xff] %vm93, %v1030
    %1095 = vst.msk [vmem:[#allocation5 + $0xd0] sm:$0xff] %vm93, %v1031
    %1096 = vst.msk [vmem:[#allocation5 + $0xd8] sm:$0xff] %vm93, %v1032
    %1097 = vst.msk [vmem:[#allocation5 + $0xe0] sm:$0xff] %vm93, %v1033
    %1098 = vst.msk [vmem:[#allocation5 + $0xe8] sm:$0xff] %vm93, %v1034
    %1099 = vst.msk [vmem:[#allocation5 + $0xf0] sm:$0xff] %vm93, %v1035
    %1100 = vst.msk [vmem:[#allocation5 + $0xf8] sm:$0xff] %vm93, %v1036
    %1101 = vst.msk [vmem:[#allocation5 + $0x100] sm:$0xff] %vm93, %v1037
    %1102 = vst.msk [vmem:[#allocation5 + $0x108] sm:$0xff] %vm93, %v1038
    %1103 = vst.msk [vmem:[#allocation5 + $0x110] sm:$0xff] %vm93, %v1039
    %1104 = vst.msk [vmem:[#allocation5 + $0x118] sm:$0xff] %vm93, %v1040
    %1105 = vst.msk [vmem:[#allocation5 + $0x120] sm:$0xff] %vm93, %v1041
    %1106 = vst.msk [vmem:[#allocation5 + $0x128] sm:$0xff] %vm93, %v1042
    %1107 = vst.msk [vmem:[#allocation5 + $0x130] sm:$0xff] %vm93, %v1043
    %1108 = vst.msk [vmem:[#allocation5 + $0x138] sm:$0xff] %vm93, %v1044
    %1109 = vst.msk [vmem:[#allocation5 + $0x140] sm:$0xff] %vm93, %v1045
    %1110 = vst.msk [vmem:[#allocation5 + $0x148] sm:$0xff] %vm93, %v1046
    %1111 = vst.msk [vmem:[#allocation5 + $0x150] sm:$0xff] %vm93, %v1047
    %1112 = vst.msk [vmem:[#allocation5 + $0x158] sm:$0xff] %vm93, %v1048
    %1113 = vst.msk [vmem:[#allocation5 + $0x160] sm:$0xff] %vm93, %v1049
    %1114 = vst.msk [vmem:[#allocation5 + $0x168] sm:$0xff] %vm93, %v1050
    %1115 = vst.msk [vmem:[#allocation5 + $0x170] sm:$0xff] %vm93, %v1051
    %1116 = vst.msk [vmem:[#allocation5 + $0x178] sm:$0xff] %vm93, %v1052
    %1117 = vst.msk [vmem:[#allocation5 + $0x180] sm:$0xff] %vm93, %v1053
    %1118 = vst.msk [vmem:[#allocation5 + $0x188] sm:$0xff] %vm93, %v1054
    %1119 = vst.msk [vmem:[#allocation5 + $0x190] sm:$0xff] %vm93, %v1055
    %1120 = vst.msk [vmem:[#allocation5 + $0x198] sm:$0xff] %vm93, %v1056
    %1121 = vst.msk [vmem:[#allocation5 + $0x1a0] sm:$0xff] %vm93, %v1057
    %1122 = vst.msk [vmem:[#allocation5 + $0x1a8] sm:$0xff] %vm93, %v1058
    %1123 = vst.msk [vmem:[#allocation5 + $0x1b0] sm:$0xff] %vm93, %v1059
    %1124 = vst.msk [vmem:[#allocation5 + $0x1b8] sm:$0xff] %vm93, %v1060
    %1125 = vst.msk [vmem:[#allocation5 + $0x1c0] sm:$0xff] %vm93, %v1061
    %1126 = vst.msk [vmem:[#allocation5 + $0x1c8] sm:$0xff] %vm93, %v1062
    %1127 = vst.msk [vmem:[#allocation5 + $0x1d0] sm:$0xff] %vm93, %v1063
    %1128 = vst.msk [vmem:[#allocation5 + $0x1d8] sm:$0xff] %vm93, %v1064
    %1129 = vst.msk [vmem:[#allocation5 + $0x1e0] sm:$0xff] %vm93, %v1065
    %1130 = vst.msk [vmem:[#allocation5 + $0x1e8] sm:$0xff] %vm93, %v1066
    %1131 = vst.msk [vmem:[#allocation5 + $0x1f0] sm:$0xff] %vm93, %v1067
    %1132 = vst.msk [vmem:[#allocation5 + $0x1f8] sm:$0xff] %vm93, %v1068
    // Predicated region
    $region18: #{with_bias_layernorm.1} parent=1 // pred_check
      _
    $region19: #{with_bias_layernorm.1} parent=1 // pred_check_branch
      %1134 = sbr.rel (0) target = $region21
    $region20: #{with_bias_layernorm.1} parent=1 // pred_region
      %s1136 = ssub.s32 8192, 8192
      %1137 = vsyncadd [#allocation4], %s1136
      %s1138 = sshll.u32 [#allocation5], 4
      %s1139 = int_to_ptr.vmem [resolvable:$true] %s1138
      %1144 = dma.vmem_to_hbm [thread:$0]  %s1139, 8192, %s3, [#allocation4], 128, 128, 8
    $region21: #{with_bias_layernorm.1} parent=1 // pred_fallthru
      _
    // Predicated region
    $region22: #{with_bias_layernorm.1} parent=1 // pred_check
      _
    $region23: #{with_bias_layernorm.1} parent=1 // pred_check_branch
      %1146 = sbr.rel (0) target = $region25
    $region24: #{with_bias_layernorm.1} parent=1 // pred_region
      %1147 = dma.done [#allocation4], 8192
    $region25: #{with_bias_layernorm.1} parent=1 // pred_fallthru
      _
    %1148 = vsyncpa [#allocation3], 1
    %1149 = vsyncpa [#allocation4], 1

</llo_original>
